<compile_context>
chip_gen: v7x
topology: tpu7x:2x2x1
jax: 0.10.0
libtpu: 0.0.40
codegen_flags: <defaults>
</compile_context>

<pallas_src>
import functools

import jax
import jax.numpy as jnp
from jax.experimental import pallas as pl
from jax.experimental.pallas import tpu as pltpu


def _round_up(x: int, m: int) -> int:
    return ((x + m - 1) // m) * m


def highway_kernel(x_ref, wh_ref, wg_ref, bg_ref, o_ref, *, n_layer: int):
    # x_ref: (tm, F) tile of the flattened input.
    # wh_ref, wg_ref: (L, F, F) stacked weights already in x@W layout.
    # bg_ref: (L, 1, F) stacked gate biases.
    x = x_ref[...].astype(jnp.float32)                         # (tm, F)

    # n_layer is small and static -> unrolled Python loop keeps everything
    # visible to the scheduler; each iteration is 2 MXU matmuls + EUP/VPU.
    for l in range(n_layer):
        h = jnp.dot(x, wh_ref[l], preferred_element_type=jnp.float32)
        h = jnp.maximum(h, 0.0)                                # ReLU (VPU)
        g = jnp.dot(x, wg_ref[l], preferred_element_type=jnp.float32)
        g = jax.nn.sigmoid(g + bg_ref[l])                      # EUP
        # (1 - g) * x + g * h  ==  x + g * (h - x)
        x = x + g * (h - x)

    o_ref[...] = x.astype(o_ref.dtype)


def highway_network(x, wh, wg, bg, *, tile_m: int = 256):
    """HighwayNetwork forward.

    Args:
      x:  (..., F) input (e.g. (B, T, F)).
      wh: (L, F, F) network-layer weights, PyTorch (out, in) layout, no bias.
      wg: (L, F, F) gate weights, PyTorch (out, in) layout.
      bg: (L, F)    gate biases.
    Returns:
      Array with the same shape/dtype as x.
    """
    orig_shape = x.shape
    F = orig_shape[-1]
    L = wh.shape[0]

    # Fold batch/seq into the matmul M dimension.
    x2 = x.reshape(-1, F)
    M = x2.shape[0]

    # Tile M; pad up so every tile is full (padded rows are sliced off after).
    tm = min(tile_m, _round_up(M, 8))
    M_pad = _round_up(M, tm)
    if M_pad != M:
        x2 = jnp.pad(x2, ((0, M_pad - M), (0, 0)))

    # PyTorch Linear computes x @ W^T; pre-transpose so the kernel does x @ W.
    wh_t = jnp.swapaxes(wh, 1, 2)          # (L, F, F)  in x@W layout
    wg_t = jnp.swapaxes(wg, 1, 2)          # (L, F, F)
    bg_3d = bg.reshape(L, 1, F)            # (L, 1, F)

    grid = (M_pad // tm,)

    grid_spec = pltpu.PrefetchScalarGridSpec(
        num_scalar_prefetch=0,
        grid=grid,
        in_specs=[
            pl.BlockSpec((tm, F), lambda i: (i, 0)),       # x tile
            pl.BlockSpec((L, F, F), lambda i: (0, 0, 0)),  # Wh^T (resident)
            pl.BlockSpec((L, F, F), lambda i: (0, 0, 0)),  # Wg^T (resident)
            pl.BlockSpec((L, 1, F), lambda i: (0, 0, 0)),  # bg   (resident)
        ],
        out_specs=pl.BlockSpec((tm, F), lambda i: (i, 0)),
    )

    out = pl.pallas_call(
        functools.partial(highway_kernel, n_layer=L),
        out_shape=jax.ShapeDtypeStruct((M_pad, F), x.dtype),
        grid_spec=grid_spec,
        compiler_params=pltpu.CompilerParams(
            dimension_semantics=("parallel",)),
    )(x2, wh_t, wg_t, bg_3d)

    if M_pad != M:
        out = out[:M]
    return out.reshape(orig_shape)


def _reference(x, wh, wg, bg):
    # Pure-JAX mirror of the PyTorch forward, for correctness checking.
    for l in range(wh.shape[0]):
        h = jnp.maximum(x @ wh[l].T, 0.0)
        g = jax.nn.sigmoid(x @ wg[l].T + bg[l])
        x = (1.0 - g) * x + g * h
    return x


if __name__ == "__main__":
    # Small shapes consistent with the module: fc_dim=128, n_layer=4, seq data.
    B, T, F, L = 2, 8, 128, 4

    key = jax.random.PRNGKey(0)
    k_x, k_wh, k_wg = jax.random.split(key, 3)

    x = jax.random.normal(k_x, (B, T, F), dtype=jnp.float32)

    # Synthetic parameters matching HighwayNetwork._init_layer:
    #   kaiming-normal weights, gate bias = -1, layer Linear has no bias.
    kaiming_std = (2.0 / F) ** 0.5
    wh = kaiming_std * jax.random.normal(k_wh, (L, F, F), dtype=jnp.float32)  # (out,in)
    wg = kaiming_std * jax.random.normal(k_wg, (L, F, F), dtype=jnp.float32)  # (out,in)
    bg = jnp.full((L, F), -1.0, dtype=jnp.float32)

    out = highway_network(x, wh, wg, bg)
    jax.block_until_ready(out)

    ref = _reference(x, wh, wg, bg)
    assert out.shape == ref.shape, "shape mismatch"
    assert jnp.allclose(out, ref, atol=1e-4, rtol=1e-4), "highway output mismatch"

    print("KERNEL_OK")
</pallas_src>

<mosaic_0001>
module attributes {stable_mosaic.version = 11 : i64} {
  func.func @highway_kernel(%arg0: i32, %arg1: memref<16x128xf32, #tpu.memory_space<vmem>>, %arg2: memref<4x128x128xf32, #tpu.memory_space<vmem>>, %arg3: memref<4x128x128xf32, #tpu.memory_space<vmem>>, %arg4: memref<4x1x128xf32, #tpu.memory_space<vmem>>, %arg5: memref<16x128xf32, #tpu.memory_space<vmem>>) attributes {dimension_semantics = [#tpu.dimension_semantics<parallel>], iteration_bounds = array<i64: 1>, scalar_prefetch = 0 : i64, scratch_operands = 0 : i64, tpu.core_type = #tpu.core_type<tc>, window_params = [{transform_indices = @transform_0, window_bounds = array<i64: 16, 128>}, {pipeline_mode = #tpu.pipeline_mode<synchronous>, transform_indices = @transform_1, window_bounds = array<i64: 4, 128, 128>}, {pipeline_mode = #tpu.pipeline_mode<synchronous>, transform_indices = @transform_2, window_bounds = array<i64: 4, 128, 128>}, {pipeline_mode = #tpu.pipeline_mode<synchronous>, transform_indices = @transform_3, window_bounds = array<i64: 4, 1, 128>}, {transform_indices = @transform_4, window_bounds = array<i64: 16, 128>}]} {
    %c0 = arith.constant 0 : index
    %c0_0 = arith.constant 0 : index
    %0 = vector.load %arg1[%c0, %c0_0] : memref<16x128xf32, #tpu.memory_space<vmem>>, vector<16x128xf32>
    %c0_1 = arith.constant 0 : index
    %c0_2 = arith.constant 0 : index
    %c0_3 = arith.constant 0 : index
    %1 = vector.load %arg2[%c0_1, %c0_2, %c0_3] : memref<4x128x128xf32, #tpu.memory_space<vmem>>, vector<1x128x128xf32>
    %2 = vector.shape_cast %1 : vector<1x128x128xf32> to vector<128x128xf32>
    %cst = arith.constant dense<0.000000e+00> : vector<16x128xf32>
    %3 = tpu.matmul %0, %2, %cst {dimension_numbers = #tpu.dot_dimension_numbers<[1], [0], [0], [1], [0, 0, 1, 1], [], []>} : vector<16x128xf32>, vector<128x128xf32>, vector<16x128xf32> -> vector<16x128xf32>
    %cst_4 = arith.constant 0.000000e+00 : f32
    %4 = vector.broadcast %cst_4 : f32 to vector<16x128xf32>
    %5 = arith.maximumf %3, %4 : vector<16x128xf32>
    %c0_5 = arith.constant 0 : index
    %c0_6 = arith.constant 0 : index
    %c0_7 = arith.constant 0 : index
    %6 = vector.load %arg3[%c0_5, %c0_6, %c0_7] : memref<4x128x128xf32, #tpu.memory_space<vmem>>, vector<1x128x128xf32>
    %7 = vector.shape_cast %6 : vector<1x128x128xf32> to vector<128x128xf32>
    %cst_8 = arith.constant dense<0.000000e+00> : vector<16x128xf32>
    %8 = tpu.matmul %0, %7, %cst_8 {dimension_numbers = #tpu.dot_dimension_numbers<[1], [0], [0], [1], [0, 0, 1, 1], [], []>} : vector<16x128xf32>, vector<128x128xf32>, vector<16x128xf32> -> vector<16x128xf32>
    %c0_9 = arith.constant 0 : index
    %c0_10 = arith.constant 0 : index
    %c0_11 = arith.constant 0 : index
    %9 = vector.load %arg4[%c0_9, %c0_10, %c0_11] : memref<4x1x128xf32, #tpu.memory_space<vmem>>, vector<1x1x128xf32>
    %10 = vector.shape_cast %9 : vector<1x1x128xf32> to vector<1x128xf32>
    %11 = vector.broadcast %10 : vector<1x128xf32> to vector<16x128xf32>
    %12 = arith.addf %8, %11 : vector<16x128xf32>
    %13 = arith.negf %12 : vector<16x128xf32>
    %14 = math.exp %13 : vector<16x128xf32>
    %cst_12 = arith.constant 1.000000e+00 : f32
    %15 = vector.broadcast %cst_12 : f32 to vector<16x128xf32>
    %16 = arith.addf %15, %14 : vector<16x128xf32>
    %17 = arith.divf %15, %16 : vector<16x128xf32>
    %18 = arith.subf %5, %0 : vector<16x128xf32>
    %19 = arith.mulf %17, %18 : vector<16x128xf32>
    %20 = arith.addf %0, %19 : vector<16x128xf32>
    %c1 = arith.constant 1 : index
    %c0_13 = arith.constant 0 : index
    %c0_14 = arith.constant 0 : index
    %21 = vector.load %arg2[%c1, %c0_13, %c0_14] : memref<4x128x128xf32, #tpu.memory_space<vmem>>, vector<1x128x128xf32>
    %22 = vector.shape_cast %21 : vector<1x128x128xf32> to vector<128x128xf32>
    %cst_15 = arith.constant dense<0.000000e+00> : vector<16x128xf32>
    %23 = tpu.matmul %20, %22, %cst_15 {dimension_numbers = #tpu.dot_dimension_numbers<[1], [0], [0], [1], [0, 0, 1, 1], [], []>} : vector<16x128xf32>, vector<128x128xf32>, vector<16x128xf32> -> vector<16x128xf32>
    %cst_16 = arith.constant 0.000000e+00 : f32
    %24 = vector.broadcast %cst_16 : f32 to vector<16x128xf32>
    %25 = arith.maximumf %23, %24 : vector<16x128xf32>
    %c1_17 = arith.constant 1 : index
    %c0_18 = arith.constant 0 : index
    %c0_19 = arith.constant 0 : index
    %26 = vector.load %arg3[%c1_17, %c0_18, %c0_19] : memref<4x128x128xf32, #tpu.memory_space<vmem>>, vector<1x128x128xf32>
    %27 = vector.shape_cast %26 : vector<1x128x128xf32> to vector<128x128xf32>
    %cst_20 = arith.constant dense<0.000000e+00> : vector<16x128xf32>
    %28 = tpu.matmul %20, %27, %cst_20 {dimension_numbers = #tpu.dot_dimension_numbers<[1], [0], [0], [1], [0, 0, 1, 1], [], []>} : vector<16x128xf32>, vector<128x128xf32>, vector<16x128xf32> -> vector<16x128xf32>
    %c1_21 = arith.constant 1 : index
    %c0_22 = arith.constant 0 : index
    %c0_23 = arith.constant 0 : index
    %29 = vector.load %arg4[%c1_21, %c0_22, %c0_23] : memref<4x1x128xf32, #tpu.memory_space<vmem>>, vector<1x1x128xf32>
    %30 = vector.shape_cast %29 : vector<1x1x128xf32> to vector<1x128xf32>
    %31 = vector.broadcast %30 : vector<1x128xf32> to vector<16x128xf32>
    %32 = arith.addf %28, %31 : vector<16x128xf32>
    %33 = arith.negf %32 : vector<16x128xf32>
    %34 = math.exp %33 : vector<16x128xf32>
    %cst_24 = arith.constant 1.000000e+00 : f32
    %35 = vector.broadcast %cst_24 : f32 to vector<16x128xf32>
    %36 = arith.addf %35, %34 : vector<16x128xf32>
    %37 = arith.divf %35, %36 : vector<16x128xf32>
    %38 = arith.subf %25, %20 : vector<16x128xf32>
    %39 = arith.mulf %37, %38 : vector<16x128xf32>
    %40 = arith.addf %20, %39 : vector<16x128xf32>
    %c2 = arith.constant 2 : index
    %c0_25 = arith.constant 0 : index
    %c0_26 = arith.constant 0 : index
    %41 = vector.load %arg2[%c2, %c0_25, %c0_26] : memref<4x128x128xf32, #tpu.memory_space<vmem>>, vector<1x128x128xf32>
    %42 = vector.shape_cast %41 : vector<1x128x128xf32> to vector<128x128xf32>
    %cst_27 = arith.constant dense<0.000000e+00> : vector<16x128xf32>
    %43 = tpu.matmul %40, %42, %cst_27 {dimension_numbers = #tpu.dot_dimension_numbers<[1], [0], [0], [1], [0, 0, 1, 1], [], []>} : vector<16x128xf32>, vector<128x128xf32>, vector<16x128xf32> -> vector<16x128xf32>
    %cst_28 = arith.constant 0.000000e+00 : f32
    %44 = vector.broadcast %cst_28 : f32 to vector<16x128xf32>
    %45 = arith.maximumf %43, %44 : vector<16x128xf32>
    %c2_29 = arith.constant 2 : index
    %c0_30 = arith.constant 0 : index
    %c0_31 = arith.constant 0 : index
    %46 = vector.load %arg3[%c2_29, %c0_30, %c0_31] : memref<4x128x128xf32, #tpu.memory_space<vmem>>, vector<1x128x128xf32>
    %47 = vector.shape_cast %46 : vector<1x128x128xf32> to vector<128x128xf32>
    %cst_32 = arith.constant dense<0.000000e+00> : vector<16x128xf32>
    %48 = tpu.matmul %40, %47, %cst_32 {dimension_numbers = #tpu.dot_dimension_numbers<[1], [0], [0], [1], [0, 0, 1, 1], [], []>} : vector<16x128xf32>, vector<128x128xf32>, vector<16x128xf32> -> vector<16x128xf32>
    %c2_33 = arith.constant 2 : index
    %c0_34 = arith.constant 0 : index
    %c0_35 = arith.constant 0 : index
    %49 = vector.load %arg4[%c2_33, %c0_34, %c0_35] : memref<4x1x128xf32, #tpu.memory_space<vmem>>, vector<1x1x128xf32>
    %50 = vector.shape_cast %49 : vector<1x1x128xf32> to vector<1x128xf32>
    %51 = vector.broadcast %50 : vector<1x128xf32> to vector<16x128xf32>
    %52 = arith.addf %48, %51 : vector<16x128xf32>
    %53 = arith.negf %52 : vector<16x128xf32>
    %54 = math.exp %53 : vector<16x128xf32>
    %cst_36 = arith.constant 1.000000e+00 : f32
    %55 = vector.broadcast %cst_36 : f32 to vector<16x128xf32>
    %56 = arith.addf %55, %54 : vector<16x128xf32>
    %57 = arith.divf %55, %56 : vector<16x128xf32>
    %58 = arith.subf %45, %40 : vector<16x128xf32>
    %59 = arith.mulf %57, %58 : vector<16x128xf32>
    %60 = arith.addf %40, %59 : vector<16x128xf32>
    %c3 = arith.constant 3 : index
    %c0_37 = arith.constant 0 : index
    %c0_38 = arith.constant 0 : index
    %61 = vector.load %arg2[%c3, %c0_37, %c0_38] : memref<4x128x128xf32, #tpu.memory_space<vmem>>, vector<1x128x128xf32>
    %62 = vector.shape_cast %61 : vector<1x128x128xf32> to vector<128x128xf32>
    %cst_39 = arith.constant dense<0.000000e+00> : vector<16x128xf32>
    %63 = tpu.matmul %60, %62, %cst_39 {dimension_numbers = #tpu.dot_dimension_numbers<[1], [0], [0], [1], [0, 0, 1, 1], [], []>} : vector<16x128xf32>, vector<128x128xf32>, vector<16x128xf32> -> vector<16x128xf32>
    %cst_40 = arith.constant 0.000000e+00 : f32
    %64 = vector.broadcast %cst_40 : f32 to vector<16x128xf32>
    %65 = arith.maximumf %63, %64 : vector<16x128xf32>
    %c3_41 = arith.constant 3 : index
    %c0_42 = arith.constant 0 : index
    %c0_43 = arith.constant 0 : index
    %66 = vector.load %arg3[%c3_41, %c0_42, %c0_43] : memref<4x128x128xf32, #tpu.memory_space<vmem>>, vector<1x128x128xf32>
    %67 = vector.shape_cast %66 : vector<1x128x128xf32> to vector<128x128xf32>
    %cst_44 = arith.constant dense<0.000000e+00> : vector<16x128xf32>
    %68 = tpu.matmul %60, %67, %cst_44 {dimension_numbers = #tpu.dot_dimension_numbers<[1], [0], [0], [1], [0, 0, 1, 1], [], []>} : vector<16x128xf32>, vector<128x128xf32>, vector<16x128xf32> -> vector<16x128xf32>
    %c3_45 = arith.constant 3 : index
    %c0_46 = arith.constant 0 : index
    %c0_47 = arith.constant 0 : index
    %69 = vector.load %arg4[%c3_45, %c0_46, %c0_47] : memref<4x1x128xf32, #tpu.memory_space<vmem>>, vector<1x1x128xf32>
    %70 = vector.shape_cast %69 : vector<1x1x128xf32> to vector<1x128xf32>
    %71 = vector.broadcast %70 : vector<1x128xf32> to vector<16x128xf32>
    %72 = arith.addf %68, %71 : vector<16x128xf32>
    %73 = arith.negf %72 : vector<16x128xf32>
    %74 = math.exp %73 : vector<16x128xf32>
    %cst_48 = arith.constant 1.000000e+00 : f32
    %75 = vector.broadcast %cst_48 : f32 to vector<16x128xf32>
    %76 = arith.addf %75, %74 : vector<16x128xf32>
    %77 = arith.divf %75, %76 : vector<16x128xf32>
    %78 = arith.subf %65, %60 : vector<16x128xf32>
    %79 = arith.mulf %77, %78 : vector<16x128xf32>
    %80 = arith.addf %60, %79 : vector<16x128xf32>
    %c0_49 = arith.constant 0 : index
    %c0_50 = arith.constant 0 : index
    %81 = vector.load %arg5[%c0_49, %c0_50] : memref<16x128xf32, #tpu.memory_space<vmem>>, vector<16x128xf32>
    tpu.vector_store %arg5[%c0_49, %c0_50], %80 {strides = array<i32>} : memref<16x128xf32, #tpu.memory_space<vmem>>, vector<16x128xf32>,
    return
  }
  func.func @transform_0(%arg0: i32) -> (i32, i32) {
    %c0_i32 = arith.constant 0 : i32
    %c0_i32_0 = arith.constant 0 : i32
    return %arg0, %c0_i32 : i32, i32
  }
  func.func @transform_1(%arg0: i32) -> (i32, i32, i32) {
    %c0_i32 = arith.constant 0 : i32
    %c0_i32_0 = arith.constant 0 : i32
    %c0_i32_1 = arith.constant 0 : i32
    %c0_i32_2 = arith.constant 0 : i32
    return %c0_i32, %c0_i32_0, %c0_i32_1 : i32, i32, i32
  }
  func.func @transform_2(%arg0: i32) -> (i32, i32, i32) {
    %c0_i32 = arith.constant 0 : i32
    %c0_i32_0 = arith.constant 0 : i32
    %c0_i32_1 = arith.constant 0 : i32
    %c0_i32_2 = arith.constant 0 : i32
    return %c0_i32, %c0_i32_0, %c0_i32_1 : i32, i32, i32
  }
  func.func @transform_3(%arg0: i32) -> (i32, i32, i32) {
    %c0_i32 = arith.constant 0 : i32
    %c0_i32_0 = arith.constant 0 : i32
    %c0_i32_1 = arith.constant 0 : i32
    %c0_i32_2 = arith.constant 0 : i32
    return %c0_i32, %c0_i32_0, %c0_i32_1 : i32, i32, i32
  }
  func.func @transform_4(%arg0: i32) -> (i32, i32) {
    %c0_i32 = arith.constant 0 : i32
    %c0_i32_0 = arith.constant 0 : i32
    return %arg0, %c0_i32 : i32, i32
  }
}

</mosaic_0001>

<llo_original>
// kernel: tpu_custom_call.1
$region0: #{tpu_custom_call.1}
  #allocation0 [shape = 'u32[]', space=smem, size = 0x4, offset = 0x4, fixed_abs, tag = 'smem constant byte address 0x4 - core index']
  #allocation1 [shape = 'u32[144,128]{1,0:T(1,128)}', space=vmem, size = 0x12000, scoped, tag = 'internal scratch']
  %s0 = inlined_call_operand.hbm [shape: f32[16,128], index: 0, kind: input, shape index: {}]
  %s1 = inlined_call_operand.hbm [shape: f32[4,128,128], index: 1, kind: input, shape index: {}]
  %s2 = inlined_call_operand.hbm [shape: f32[4,128,128], index: 2, kind: input, shape index: {}]
  %s3 = inlined_call_operand.vmem [shape: f32[4,1,128], index: 3, kind: input, shape index: {}]
  %s4 = inlined_call_operand.hbm [shape: f32[16,128], index: 4, kind: output, shape index: {}]
  %s5 = sld [smem:[#allocation0]]
  $region38: #{tpu_custom_call.1} parent=0
    _
  %s7 = ssub.s32 1, %s5
  %s8 = scalar_select 0, %s7, %s5
  $region1: #{tpu_custom_call.1} parent=0
    #allocation2 [shape = 'u8[8192]{0}', space=vmem, size = 0x2000, scoped, tag = 'input window, operand 0, single buffered']
    #allocation3 [shape = 's32[1]{0}', space=sflag, size = 0x4, scoped, tag = 'scoped memory for tpu_custom_call.1']
    #allocation4 [shape = 's32[1]{0}', space=sflag, size = 0x4, scoped, tag = 'scoped memory for tpu_custom_call.1']
    #allocation5 [shape = 'u8[262144]{0}', space=vmem, size = 0x40000, scoped, tag = 'input window, operand 1, single buffered']
    #allocation6 [shape = 's32[1]{0}', space=sflag, size = 0x4, scoped, tag = 'scoped memory for tpu_custom_call.1']
    #allocation7 [shape = 'u8[262144]{0}', space=vmem, size = 0x40000, scoped, tag = 'input window, operand 2, single buffered']
    #allocation8 [shape = 'u8[8192]{0}', space=vmem, size = 0x2000, scoped, tag = 'output window, operand 0, single buffered']
    %9 = vsyncpa [#allocation3], 0
    %10 = vsyncpa [#allocation6], 0
    %11 = vsyncpa [#allocation4], 0
    // Predicated region
    $region2: #{tpu_custom_call.1} parent=1 // pred_check
      _
    $region3: #{tpu_custom_call.1} parent=1 // pred_check_branch
      %13 = sbr.rel (0) target = $region5
    $region4: #{tpu_custom_call.1} parent=1 // pred_region
      %s15 = ssub.s32 256, 256
      %16 = vsyncadd [#allocation3], %s15
      %s17 = sshll.u32 [#allocation2], 4
      %s18 = int_to_ptr.vmem [resolvable:$true] %s17
      %23 = dma.hbm_to_vmem [thread:$0]  %s0, 256, %s18, [#allocation3], 128, 128, 8
    $region5: #{tpu_custom_call.1} parent=1 // pred_fallthru
      _
    // Predicated region
    $region6: #{tpu_custom_call.1} parent=1 // pred_check
      _
    $region7: #{tpu_custom_call.1} parent=1 // pred_check_branch
      %25 = sbr.rel (0) target = $region9
    $region8: #{tpu_custom_call.1} parent=1 // pred_region
      %s27 = ssub.s32 8192, 8192
      %28 = vsyncadd [#allocation6], %s27
      %s29 = sshll.u32 [#allocation5], 4
      %s30 = int_to_ptr.vmem [resolvable:$true] %s29
      %35 = dma.hbm_to_vmem [thread:$0]  %s1, 8192, %s30, [#allocation6], 128, 128, 8
    $region9: #{tpu_custom_call.1} parent=1 // pred_fallthru
      _
    // Predicated region
    $region10: #{tpu_custom_call.1} parent=1 // pred_check
      _
    $region11: #{tpu_custom_call.1} parent=1 // pred_check_branch
      %37 = sbr.rel (0) target = $region13
    $region12: #{tpu_custom_call.1} parent=1 // pred_region
      %s39 = ssub.s32 8192, 8192
      %40 = vsyncadd [#allocation6], %s39
      %s41 = sshll.u32 [#allocation7], 4
      %s42 = int_to_ptr.vmem [resolvable:$true] %s41
      %47 = dma.hbm_to_vmem [thread:$0]  %s2, 8192, %s42, [#allocation6], 128, 128, 8
    $region13: #{tpu_custom_call.1} parent=1 // pred_fallthru
      _
    // Predicated region
    $region14: #{tpu_custom_call.1} parent=1 // pred_check
      _
    $region15: #{tpu_custom_call.1} parent=1 // pred_check_branch
      %49 = sbr.rel (0) target = $region17
    $region16: #{tpu_custom_call.1} parent=1 // pred_region
      _
    $region17: #{tpu_custom_call.1} parent=1 // pred_fallthru
      _
    // Predicated region
    $region18: #{tpu_custom_call.1} parent=1 // pred_check
      _
    $region19: #{tpu_custom_call.1} parent=1 // pred_check_branch
      %51 = sbr.rel (0) target = $region21
    $region20: #{tpu_custom_call.1} parent=1 // pred_region
      %52 = dma.done [#allocation3], 256
    $region21: #{tpu_custom_call.1} parent=1 // pred_fallthru
      _
    // Predicated region
    $region22: #{tpu_custom_call.1} parent=1 // pred_check
      _
    $region23: #{tpu_custom_call.1} parent=1 // pred_check_branch
      %54 = sbr.rel (0) target = $region25
    $region24: #{tpu_custom_call.1} parent=1 // pred_region
      %55 = dma.done [#allocation6], 8192
    $region25: #{tpu_custom_call.1} parent=1 // pred_fallthru
      _
    // Predicated region
    $region26: #{tpu_custom_call.1} parent=1 // pred_check
      _
    $region27: #{tpu_custom_call.1} parent=1 // pred_check_branch
      %57 = sbr.rel (0) target = $region29
    $region28: #{tpu_custom_call.1} parent=1 // pred_region
      %58 = dma.done [#allocation6], 8192
    $region29: #{tpu_custom_call.1} parent=1 // pred_fallthru
      _
    %v59 = vld [vmem:[#allocation2] sm:$0xff]
    %v60 = vld [vmem:[#allocation2 + $0x8] sm:$0xff]
    %v61 = vld [vmem:[#allocation5] sm:$0xff]
    %v62 = vld [vmem:[#allocation5 + $0x8] sm:$0xff]
    %v63 = vld [vmem:[#allocation5 + $0x10] sm:$0xff]
    %v64 = vld [vmem:[#allocation5 + $0x18] sm:$0xff]
    %v65 = vld [vmem:[#allocation5 + $0x20] sm:$0xff]
    %v66 = vld [vmem:[#allocation5 + $0x28] sm:$0xff]
    %v67 = vld [vmem:[#allocation5 + $0x30] sm:$0xff]
    %v68 = vld [vmem:[#allocation5 + $0x38] sm:$0xff]
    %v69 = vld [vmem:[#allocation5 + $0x40] sm:$0xff]
    %v70 = vld [vmem:[#allocation5 + $0x48] sm:$0xff]
    %v71 = vld [vmem:[#allocation5 + $0x50] sm:$0xff]
    %v72 = vld [vmem:[#allocation5 + $0x58] sm:$0xff]
    %v73 = vld [vmem:[#allocation5 + $0x60] sm:$0xff]
    %v74 = vld [vmem:[#allocation5 + $0x68] sm:$0xff]
    %v75 = vld [vmem:[#allocation5 + $0x70] sm:$0xff]
    %v76 = vld [vmem:[#allocation5 + $0x78] sm:$0xff]
    %77 = vmatprep.subr.mxu0 0.0
    %78 = vmatpush1.msra.mxu0 %v61
    %79 = vmatprep.subr.mxu0 0.0
    %80 = vmatpush1.msra.mxu0 %v62
    %81 = vmatprep.subr.mxu0 0.0
    %82 = vmatpush1.msra.mxu0 %v63
    %83 = vmatprep.subr.mxu0 0.0
    %84 = vmatpush1.msra.mxu0 %v64
    %85 = vmatprep.subr.mxu0 0.0
    %86 = vmatpush1.msra.mxu0 %v65
    %87 = vmatprep.subr.mxu0 0.0
    %88 = vmatpush1.msra.mxu0 %v66
    %89 = vmatprep.subr.mxu0 0.0
    %90 = vmatpush1.msra.mxu0 %v67
    %91 = vmatprep.subr.mxu0 0.0
    %92 = vmatpush1.msra.mxu0 %v68
    %93 = vmatprep.subr.mxu0 0.0
    %94 = vmatpush1.msra.mxu0 %v69
    %95 = vmatprep.subr.mxu0 0.0
    %96 = vmatpush1.msra.mxu0 %v70
    %97 = vmatprep.subr.mxu0 0.0
    %98 = vmatpush1.msra.mxu0 %v71
    %99 = vmatprep.subr.mxu0 0.0
    %100 = vmatpush1.msra.mxu0 %v72
    %101 = vmatprep.subr.mxu0 0.0
    %102 = vmatpush1.msra.mxu0 %v73
    %103 = vmatprep.subr.mxu0 0.0
    %104 = vmatpush1.msra.mxu0 %v74
    %105 = vmatprep.subr.mxu0 0.0
    %106 = vmatpush1.msra.mxu0 %v75
    %107 = vmatprep.subr.mxu0 0.0
    %108 = vmatpush1.msra.mxu0 %v76
    %109 = vmatprep.subr.mxu0 0.0
    %110 = vmatpush1.msra.mxu0 0.0
    %111 = vmatprep.subr.mxu0 0.0
    %112 = vmatpush1.msra.mxu0 0.0
    %113 = vmatprep.subr.mxu0 0.0
    %114 = vmatpush1.msra.mxu0 0.0
    %115 = vmatprep.subr.mxu0 0.0
    %116 = vmatpush1.msra.mxu0 0.0
    %117 = vmatprep.subr.mxu0 0.0
    %118 = vmatpush1.msra.mxu0 0.0
    %119 = vmatprep.subr.mxu0 0.0
    %120 = vmatpush1.msra.mxu0 0.0
    %121 = vmatprep.subr.mxu0 0.0
    %122 = vmatpush1.msra.mxu0 0.0
    %123 = vmatprep.subr.mxu0 0.0
    %124 = vmatpush1.msra.mxu0 0.0
    %125 = vmatprep.subr.mxu0 0.0
    %126 = vmatpush1.msra.mxu0 0.0
    %127 = vmatprep.subr.mxu0 0.0
    %128 = vmatpush1.msra.mxu0 0.0
    %129 = vmatprep.subr.mxu0 0.0
    %130 = vmatpush1.msra.mxu0 0.0
    %131 = vmatprep.subr.mxu0 0.0
    %132 = vmatpush1.msra.mxu0 0.0
    %133 = vmatprep.subr.mxu0 0.0
    %134 = vmatpush1.msra.mxu0 0.0
    %135 = vmatprep.subr.mxu0 0.0
    %136 = vmatpush1.msra.mxu0 0.0
    %137 = vmatprep.subr.mxu0 0.0
    %138 = vmatpush1.msra.mxu0 0.0
    %139 = vmatprep.subr.mxu0 0.0
    %140 = vmatpush1.msra.mxu0 0.0
    %141 = vmatprep.mubr.f32.mxu0 0.0
    %142 = vmatmul.mubr.f32.gmra.mrb[0].mxu0 %v59
    %v143 = vpop.f32.mrb[0].mxu0
    %v144 = vadd.f32 0.0, %v143
    %v145 = vpop.f32.mrb[0].mxu0
    %146 = vmatprep.mubr.f32.mxu0 0.0
    %147 = vmatmul.mubr.f32.gmra.mrb[0].mxu0 %v60
    %v148 = vpop.f32.mrb[0].mxu0
    %v149 = vadd.f32 0.0, %v148
    %v150 = vpop.f32.mrb[0].mxu0
    %151 = vdwg.mxu0
    %v152 = vmax.f32 %v144, 0.0
    %v153 = vmax.f32 %v149, 0.0
    %v154 = vld [vmem:[#allocation7] sm:$0xff]
    %v155 = vld [vmem:[#allocation7 + $0x8] sm:$0xff]
    %v156 = vld [vmem:[#allocation7 + $0x10] sm:$0xff]
    %v157 = vld [vmem:[#allocation7 + $0x18] sm:$0xff]
    %v158 = vld [vmem:[#allocation7 + $0x20] sm:$0xff]
    %v159 = vld [vmem:[#allocation7 + $0x28] sm:$0xff]
    %v160 = vld [vmem:[#allocation7 + $0x30] sm:$0xff]
    %v161 = vld [vmem:[#allocation7 + $0x38] sm:$0xff]
    %v162 = vld [vmem:[#allocation7 + $0x40] sm:$0xff]
    %v163 = vld [vmem:[#allocation7 + $0x48] sm:$0xff]
    %v164 = vld [vmem:[#allocation7 + $0x50] sm:$0xff]
    %v165 = vld [vmem:[#allocation7 + $0x58] sm:$0xff]
    %v166 = vld [vmem:[#allocation7 + $0x60] sm:$0xff]
    %v167 = vld [vmem:[#allocation7 + $0x68] sm:$0xff]
    %v168 = vld [vmem:[#allocation7 + $0x70] sm:$0xff]
    %v169 = vld [vmem:[#allocation7 + $0x78] sm:$0xff]
    %v170 = vld [vmem:[%s3] sm:$0x1]
    %v172 = vlaneseq
    %v173 = vshrl.u32 %v172, 7
    %v174 = vsub.s32 0, %v173
    %v175 = vrot.slane %v170, %v174
    %177 = vmatprep.subr.mxu0 0.0
    %178 = vmatpush1.msra.mxu0 %v154
    %179 = vmatprep.subr.mxu0 0.0
    %180 = vmatpush1.msra.mxu0 %v155
    %181 = vmatprep.subr.mxu0 0.0
    %182 = vmatpush1.msra.mxu0 %v156
    %183 = vmatprep.subr.mxu0 0.0
    %184 = vmatpush1.msra.mxu0 %v157
    %185 = vmatprep.subr.mxu0 0.0
    %186 = vmatpush1.msra.mxu0 %v158
    %187 = vmatprep.subr.mxu0 0.0
    %188 = vmatpush1.msra.mxu0 %v159
    %189 = vmatprep.subr.mxu0 0.0
    %190 = vmatpush1.msra.mxu0 %v160
    %191 = vmatprep.subr.mxu0 0.0
    %192 = vmatpush1.msra.mxu0 %v161
    %193 = vmatprep.subr.mxu0 0.0
    %194 = vmatpush1.msra.mxu0 %v162
    %195 = vmatprep.subr.mxu0 0.0
    %196 = vmatpush1.msra.mxu0 %v163
    %197 = vmatprep.subr.mxu0 0.0
    %198 = vmatpush1.msra.mxu0 %v164
    %199 = vmatprep.subr.mxu0 0.0
    %200 = vmatpush1.msra.mxu0 %v165
    %201 = vmatprep.subr.mxu0 0.0
    %202 = vmatpush1.msra.mxu0 %v166
    %203 = vmatprep.subr.mxu0 0.0
    %204 = vmatpush1.msra.mxu0 %v167
    %205 = vmatprep.subr.mxu0 0.0
    %206 = vmatpush1.msra.mxu0 %v168
    %207 = vmatprep.subr.mxu0 0.0
    %208 = vmatpush1.msra.mxu0 %v169
    %209 = vmatprep.subr.mxu0 0.0
    %210 = vmatpush1.msra.mxu0 0.0
    %211 = vmatprep.subr.mxu0 0.0
    %212 = vmatpush1.msra.mxu0 0.0
    %213 = vmatprep.subr.mxu0 0.0
    %214 = vmatpush1.msra.mxu0 0.0
    %215 = vmatprep.subr.mxu0 0.0
    %216 = vmatpush1.msra.mxu0 0.0
    %217 = vmatprep.subr.mxu0 0.0
    %218 = vmatpush1.msra.mxu0 0.0
    %219 = vmatprep.subr.mxu0 0.0
    %220 = vmatpush1.msra.mxu0 0.0
    %221 = vmatprep.subr.mxu0 0.0
    %222 = vmatpush1.msra.mxu0 0.0
    %223 = vmatprep.subr.mxu0 0.0
    %224 = vmatpush1.msra.mxu0 0.0
    %225 = vmatprep.subr.mxu0 0.0
    %226 = vmatpush1.msra.mxu0 0.0
    %227 = vmatprep.subr.mxu0 0.0
    %228 = vmatpush1.msra.mxu0 0.0
    %229 = vmatprep.subr.mxu0 0.0
    %230 = vmatpush1.msra.mxu0 0.0
    %231 = vmatprep.subr.mxu0 0.0
    %232 = vmatpush1.msra.mxu0 0.0
    %233 = vmatprep.subr.mxu0 0.0
    %234 = vmatpush1.msra.mxu0 0.0
    %235 = vmatprep.subr.mxu0 0.0
    %236 = vmatpush1.msra.mxu0 0.0
    %237 = vmatprep.subr.mxu0 0.0
    %238 = vmatpush1.msra.mxu0 0.0
    %239 = vmatprep.subr.mxu0 0.0
    %240 = vmatpush1.msra.mxu0 0.0
    %241 = vmatprep.mubr.f32.mxu0 0.0
    %242 = vmatmul.mubr.f32.gmra.mrb[0].mxu0 %v59
    %v243 = vpop.f32.mrb[0].mxu0
    %v244 = vadd.f32 %v175, %v243
    %v245 = vpop.f32.mrb[0].mxu0
    %246 = vmatprep.mubr.f32.mxu0 0.0
    %247 = vmatmul.mubr.f32.gmra.mrb[0].mxu0 %v60
    %v248 = vpop.f32.mrb[0].mxu0
    %v249 = vadd.f32 %v175, %v248
    %v250 = vpop.f32.mrb[0].mxu0
    %251 = vdwg.mxu0
    %v252 = vxor.u32 %v244, 2147483648
    %v253 = vxor.u32 %v249, 2147483648
    %v254 = vmul.f32 %v252, 1.442695
    %v255 = vpow.pop %v254
    %v256 = vmul.f32 %v253, 1.442695
    %v257 = vpow.pop %v256
    %v258 = vadd.f32 %v255, 1.0
    %v259 = vadd.f32 %v257, 1.0
    %v260 = vrcp.pop %v258
    %v261 = vmul.f32 1.0, %v260
    %v262 = vrcp.pop %v259
    %v263 = vmul.f32 1.0, %v262
    %v264 = vsub.f32 %v152, %v59
    %v265 = vsub.f32 %v153, %v60
    %v266 = vmul.f32 %v261, %v264
    %v267 = vmul.f32 %v263, %v265
    %v268 = vadd.f32 %v59, %v266
    %v269 = vadd.f32 %v60, %v267
    %s270 = scalar_lea.vmem [#allocation5], 128
    %v271 = vld [vmem:[%s270] sm:$0xff]
    %v272 = vld [vmem:[%s270 + $0x8] sm:$0xff]
    %v273 = vld [vmem:[%s270 + $0x10] sm:$0xff]
    %v274 = vld [vmem:[%s270 + $0x18] sm:$0xff]
    %v275 = vld [vmem:[%s270 + $0x20] sm:$0xff]
    %v276 = vld [vmem:[%s270 + $0x28] sm:$0xff]
    %v277 = vld [vmem:[%s270 + $0x30] sm:$0xff]
    %v278 = vld [vmem:[%s270 + $0x38] sm:$0xff]
    %v279 = vld [vmem:[%s270 + $0x40] sm:$0xff]
    %v280 = vld [vmem:[%s270 + $0x48] sm:$0xff]
    %v281 = vld [vmem:[%s270 + $0x50] sm:$0xff]
    %v282 = vld [vmem:[%s270 + $0x58] sm:$0xff]
    %v283 = vld [vmem:[%s270 + $0x60] sm:$0xff]
    %v284 = vld [vmem:[%s270 + $0x68] sm:$0xff]
    %v285 = vld [vmem:[%s270 + $0x70] sm:$0xff]
    %v286 = vld [vmem:[%s270 + $0x78] sm:$0xff]
    %287 = vmatprep.subr.mxu0 0.0
    %288 = vmatpush1.msra.mxu0 %v271
    %289 = vmatprep.subr.mxu0 0.0
    %290 = vmatpush1.msra.mxu0 %v272
    %291 = vmatprep.subr.mxu0 0.0
    %292 = vmatpush1.msra.mxu0 %v273
    %293 = vmatprep.subr.mxu0 0.0
    %294 = vmatpush1.msra.mxu0 %v274
    %295 = vmatprep.subr.mxu0 0.0
    %296 = vmatpush1.msra.mxu0 %v275
    %297 = vmatprep.subr.mxu0 0.0
    %298 = vmatpush1.msra.mxu0 %v276
    %299 = vmatprep.subr.mxu0 0.0
    %300 = vmatpush1.msra.mxu0 %v277
    %301 = vmatprep.subr.mxu0 0.0
    %302 = vmatpush1.msra.mxu0 %v278
    %303 = vmatprep.subr.mxu0 0.0
    %304 = vmatpush1.msra.mxu0 %v279
    %305 = vmatprep.subr.mxu0 0.0
    %306 = vmatpush1.msra.mxu0 %v280
    %307 = vmatprep.subr.mxu0 0.0
    %308 = vmatpush1.msra.mxu0 %v281
    %309 = vmatprep.subr.mxu0 0.0
    %310 = vmatpush1.msra.mxu0 %v282
    %311 = vmatprep.subr.mxu0 0.0
    %312 = vmatpush1.msra.mxu0 %v283
    %313 = vmatprep.subr.mxu0 0.0
    %314 = vmatpush1.msra.mxu0 %v284
    %315 = vmatprep.subr.mxu0 0.0
    %316 = vmatpush1.msra.mxu0 %v285
    %317 = vmatprep.subr.mxu0 0.0
    %318 = vmatpush1.msra.mxu0 %v286
    %319 = vmatprep.subr.mxu0 0.0
    %320 = vmatpush1.msra.mxu0 0.0
    %321 = vmatprep.subr.mxu0 0.0
    %322 = vmatpush1.msra.mxu0 0.0
    %323 = vmatprep.subr.mxu0 0.0
    %324 = vmatpush1.msra.mxu0 0.0
    %325 = vmatprep.subr.mxu0 0.0
    %326 = vmatpush1.msra.mxu0 0.0
    %327 = vmatprep.subr.mxu0 0.0
    %328 = vmatpush1.msra.mxu0 0.0
    %329 = vmatprep.subr.mxu0 0.0
    %330 = vmatpush1.msra.mxu0 0.0
    %331 = vmatprep.subr.mxu0 0.0
    %332 = vmatpush1.msra.mxu0 0.0
    %333 = vmatprep.subr.mxu0 0.0
    %334 = vmatpush1.msra.mxu0 0.0
    %335 = vmatprep.subr.mxu0 0.0
    %336 = vmatpush1.msra.mxu0 0.0
    %337 = vmatprep.subr.mxu0 0.0
    %338 = vmatpush1.msra.mxu0 0.0
    %339 = vmatprep.subr.mxu0 0.0
    %340 = vmatpush1.msra.mxu0 0.0
    %341 = vmatprep.subr.mxu0 0.0
    %342 = vmatpush1.msra.mxu0 0.0
    %343 = vmatprep.subr.mxu0 0.0
    %344 = vmatpush1.msra.mxu0 0.0
    %345 = vmatprep.subr.mxu0 0.0
    %346 = vmatpush1.msra.mxu0 0.0
    %347 = vmatprep.subr.mxu0 0.0
    %348 = vmatpush1.msra.mxu0 0.0
    %349 = vmatprep.subr.mxu0 0.0
    %350 = vmatpush1.msra.mxu0 0.0
    %351 = vmatprep.mubr.f32.mxu0 0.0
    %352 = vmatmul.mubr.f32.gmra.mrb[0].mxu0 %v268
    %v353 = vpop.f32.mrb[0].mxu0
    %v354 = vadd.f32 0.0, %v353
    %v355 = vpop.f32.mrb[0].mxu0
    %356 = vmatprep.mubr.f32.mxu0 0.0
    %357 = vmatmul.mubr.f32.gmra.mrb[0].mxu0 %v269
    %v358 = vpop.f32.mrb[0].mxu0
    %v359 = vadd.f32 0.0, %v358
    %v360 = vpop.f32.mrb[0].mxu0
    %361 = vdwg.mxu0
    %v362 = vmax.f32 %v354, 0.0
    %v363 = vmax.f32 %v359, 0.0
    %s364 = scalar_lea.vmem [#allocation7], 128
    %v365 = vld [vmem:[%s364] sm:$0xff]
    %v366 = vld [vmem:[%s364 + $0x8] sm:$0xff]
    %v367 = vld [vmem:[%s364 + $0x10] sm:$0xff]
    %v368 = vld [vmem:[%s364 + $0x18] sm:$0xff]
    %v369 = vld [vmem:[%s364 + $0x20] sm:$0xff]
    %v370 = vld [vmem:[%s364 + $0x28] sm:$0xff]
    %v371 = vld [vmem:[%s364 + $0x30] sm:$0xff]
    %v372 = vld [vmem:[%s364 + $0x38] sm:$0xff]
    %v373 = vld [vmem:[%s364 + $0x40] sm:$0xff]
    %v374 = vld [vmem:[%s364 + $0x48] sm:$0xff]
    %v375 = vld [vmem:[%s364 + $0x50] sm:$0xff]
    %v376 = vld [vmem:[%s364 + $0x58] sm:$0xff]
    %v377 = vld [vmem:[%s364 + $0x60] sm:$0xff]
    %v378 = vld [vmem:[%s364 + $0x68] sm:$0xff]
    %v379 = vld [vmem:[%s364 + $0x70] sm:$0xff]
    %v380 = vld [vmem:[%s364 + $0x78] sm:$0xff]
    %s381 = scalar_lea.vmem %s3, 1
    %v382 = vld [vmem:[%s381] sm:$0x1]
    %v384 = vlaneseq
    %v385 = vshrl.u32 %v384, 7
    %v386 = vsub.s32 0, %v385
    %v387 = vrot.slane %v382, %v386
    %389 = vmatprep.subr.mxu0 0.0
    %390 = vmatpush1.msra.mxu0 %v365
    %391 = vmatprep.subr.mxu0 0.0
    %392 = vmatpush1.msra.mxu0 %v366
    %393 = vmatprep.subr.mxu0 0.0
    %394 = vmatpush1.msra.mxu0 %v367
    %395 = vmatprep.subr.mxu0 0.0
    %396 = vmatpush1.msra.mxu0 %v368
    %397 = vmatprep.subr.mxu0 0.0
    %398 = vmatpush1.msra.mxu0 %v369
    %399 = vmatprep.subr.mxu0 0.0
    %400 = vmatpush1.msra.mxu0 %v370
    %401 = vmatprep.subr.mxu0 0.0
    %402 = vmatpush1.msra.mxu0 %v371
    %403 = vmatprep.subr.mxu0 0.0
    %404 = vmatpush1.msra.mxu0 %v372
    %405 = vmatprep.subr.mxu0 0.0
    %406 = vmatpush1.msra.mxu0 %v373
    %407 = vmatprep.subr.mxu0 0.0
    %408 = vmatpush1.msra.mxu0 %v374
    %409 = vmatprep.subr.mxu0 0.0
    %410 = vmatpush1.msra.mxu0 %v375
    %411 = vmatprep.subr.mxu0 0.0
    %412 = vmatpush1.msra.mxu0 %v376
    %413 = vmatprep.subr.mxu0 0.0
    %414 = vmatpush1.msra.mxu0 %v377
    %415 = vmatprep.subr.mxu0 0.0
    %416 = vmatpush1.msra.mxu0 %v378
    %417 = vmatprep.subr.mxu0 0.0
    %418 = vmatpush1.msra.mxu0 %v379
    %419 = vmatprep.subr.mxu0 0.0
    %420 = vmatpush1.msra.mxu0 %v380
    %421 = vmatprep.subr.mxu0 0.0
    %422 = vmatpush1.msra.mxu0 0.0
    %423 = vmatprep.subr.mxu0 0.0
    %424 = vmatpush1.msra.mxu0 0.0
    %425 = vmatprep.subr.mxu0 0.0
    %426 = vmatpush1.msra.mxu0 0.0
    %427 = vmatprep.subr.mxu0 0.0
    %428 = vmatpush1.msra.mxu0 0.0
    %429 = vmatprep.subr.mxu0 0.0
    %430 = vmatpush1.msra.mxu0 0.0
    %431 = vmatprep.subr.mxu0 0.0
    %432 = vmatpush1.msra.mxu0 0.0
    %433 = vmatprep.subr.mxu0 0.0
    %434 = vmatpush1.msra.mxu0 0.0
    %435 = vmatprep.subr.mxu0 0.0
    %436 = vmatpush1.msra.mxu0 0.0
    %437 = vmatprep.subr.mxu0 0.0
    %438 = vmatpush1.msra.mxu0 0.0
    %439 = vmatprep.subr.mxu0 0.0
    %440 = vmatpush1.msra.mxu0 0.0
    %441 = vmatprep.subr.mxu0 0.0
    %442 = vmatpush1.msra.mxu0 0.0
    %443 = vmatprep.subr.mxu0 0.0
    %444 = vmatpush1.msra.mxu0 0.0
    %445 = vmatprep.subr.mxu0 0.0
    %446 = vmatpush1.msra.mxu0 0.0
    %447 = vmatprep.subr.mxu0 0.0
    %448 = vmatpush1.msra.mxu0 0.0
    %449 = vmatprep.subr.mxu0 0.0
    %450 = vmatpush1.msra.mxu0 0.0
    %451 = vmatprep.subr.mxu0 0.0
    %452 = vmatpush1.msra.mxu0 0.0
    %453 = vmatprep.mubr.f32.mxu0 0.0
    %454 = vmatmul.mubr.f32.gmra.mrb[0].mxu0 %v268
    %v455 = vpop.f32.mrb[0].mxu0
    %v456 = vadd.f32 %v387, %v455
    %v457 = vpop.f32.mrb[0].mxu0
    %458 = vmatprep.mubr.f32.mxu0 0.0
    %459 = vmatmul.mubr.f32.gmra.mrb[0].mxu0 %v269
    %v460 = vpop.f32.mrb[0].mxu0
    %v461 = vadd.f32 %v387, %v460
    %v462 = vpop.f32.mrb[0].mxu0
    %463 = vdwg.mxu0
    %v464 = vxor.u32 %v456, 2147483648
    %v465 = vxor.u32 %v461, 2147483648
    %v466 = vmul.f32 %v464, 1.442695
    %v467 = vpow.pop %v466
    %v468 = vmul.f32 %v465, 1.442695
    %v469 = vpow.pop %v468
    %v470 = vadd.f32 %v467, 1.0
    %v471 = vadd.f32 %v469, 1.0
    %v472 = vrcp.pop %v470
    %v473 = vmul.f32 1.0, %v472
    %v474 = vrcp.pop %v471
    %v475 = vmul.f32 1.0, %v474
    %v476 = vsub.f32 %v362, %v268
    %v477 = vsub.f32 %v363, %v269
    %v478 = vmul.f32 %v473, %v476
    %v479 = vmul.f32 %v475, %v477
    %v480 = vadd.f32 %v268, %v478
    %v481 = vadd.f32 %v269, %v479
    %s482 = scalar_lea.vmem [#allocation5], 256
    %v483 = vld [vmem:[%s482] sm:$0xff]
    %v484 = vld [vmem:[%s482 + $0x8] sm:$0xff]
    %v485 = vld [vmem:[%s482 + $0x10] sm:$0xff]
    %v486 = vld [vmem:[%s482 + $0x18] sm:$0xff]
    %v487 = vld [vmem:[%s482 + $0x20] sm:$0xff]
    %v488 = vld [vmem:[%s482 + $0x28] sm:$0xff]
    %v489 = vld [vmem:[%s482 + $0x30] sm:$0xff]
    %v490 = vld [vmem:[%s482 + $0x38] sm:$0xff]
    %v491 = vld [vmem:[%s482 + $0x40] sm:$0xff]
    %v492 = vld [vmem:[%s482 + $0x48] sm:$0xff]
    %v493 = vld [vmem:[%s482 + $0x50] sm:$0xff]
    %v494 = vld [vmem:[%s482 + $0x58] sm:$0xff]
    %v495 = vld [vmem:[%s482 + $0x60] sm:$0xff]
    %v496 = vld [vmem:[%s482 + $0x68] sm:$0xff]
    %v497 = vld [vmem:[%s482 + $0x70] sm:$0xff]
    %v498 = vld [vmem:[%s482 + $0x78] sm:$0xff]
    %499 = vmatprep.subr.mxu0 0.0
    %500 = vmatpush1.msra.mxu0 %v483
    %501 = vmatprep.subr.mxu0 0.0
    %502 = vmatpush1.msra.mxu0 %v484
    %503 = vmatprep.subr.mxu0 0.0
    %504 = vmatpush1.msra.mxu0 %v485
    %505 = vmatprep.subr.mxu0 0.0
    %506 = vmatpush1.msra.mxu0 %v486
    %507 = vmatprep.subr.mxu0 0.0
    %508 = vmatpush1.msra.mxu0 %v487
    %509 = vmatprep.subr.mxu0 0.0
    %510 = vmatpush1.msra.mxu0 %v488
    %511 = vmatprep.subr.mxu0 0.0
    %512 = vmatpush1.msra.mxu0 %v489
    %513 = vmatprep.subr.mxu0 0.0
    %514 = vmatpush1.msra.mxu0 %v490
    %515 = vmatprep.subr.mxu0 0.0
    %516 = vmatpush1.msra.mxu0 %v491
    %517 = vmatprep.subr.mxu0 0.0
    %518 = vmatpush1.msra.mxu0 %v492
    %519 = vmatprep.subr.mxu0 0.0
    %520 = vmatpush1.msra.mxu0 %v493
    %521 = vmatprep.subr.mxu0 0.0
    %522 = vmatpush1.msra.mxu0 %v494
    %523 = vmatprep.subr.mxu0 0.0
    %524 = vmatpush1.msra.mxu0 %v495
    %525 = vmatprep.subr.mxu0 0.0
    %526 = vmatpush1.msra.mxu0 %v496
    %527 = vmatprep.subr.mxu0 0.0
    %528 = vmatpush1.msra.mxu0 %v497
    %529 = vmatprep.subr.mxu0 0.0
    %530 = vmatpush1.msra.mxu0 %v498
    %531 = vmatprep.subr.mxu0 0.0
    %532 = vmatpush1.msra.mxu0 0.0
    %533 = vmatprep.subr.mxu0 0.0
    %534 = vmatpush1.msra.mxu0 0.0
    %535 = vmatprep.subr.mxu0 0.0
    %536 = vmatpush1.msra.mxu0 0.0
    %537 = vmatprep.subr.mxu0 0.0
    %538 = vmatpush1.msra.mxu0 0.0
    %539 = vmatprep.subr.mxu0 0.0
    %540 = vmatpush1.msra.mxu0 0.0
    %541 = vmatprep.subr.mxu0 0.0
    %542 = vmatpush1.msra.mxu0 0.0
    %543 = vmatprep.subr.mxu0 0.0
    %544 = vmatpush1.msra.mxu0 0.0
    %545 = vmatprep.subr.mxu0 0.0
    %546 = vmatpush1.msra.mxu0 0.0
    %547 = vmatprep.subr.mxu0 0.0
    %548 = vmatpush1.msra.mxu0 0.0
    %549 = vmatprep.subr.mxu0 0.0
    %550 = vmatpush1.msra.mxu0 0.0
    %551 = vmatprep.subr.mxu0 0.0
    %552 = vmatpush1.msra.mxu0 0.0
    %553 = vmatprep.subr.mxu0 0.0
    %554 = vmatpush1.msra.mxu0 0.0
    %555 = vmatprep.subr.mxu0 0.0
    %556 = vmatpush1.msra.mxu0 0.0
    %557 = vmatprep.subr.mxu0 0.0
    %558 = vmatpush1.msra.mxu0 0.0
    %559 = vmatprep.subr.mxu0 0.0
    %560 = vmatpush1.msra.mxu0 0.0
    %561 = vmatprep.subr.mxu0 0.0
    %562 = vmatpush1.msra.mxu0 0.0
    %563 = vmatprep.mubr.f32.mxu0 0.0
    %564 = vmatmul.mubr.f32.gmra.mrb[0].mxu0 %v480
    %v565 = vpop.f32.mrb[0].mxu0
    %v566 = vadd.f32 0.0, %v565
    %v567 = vpop.f32.mrb[0].mxu0
    %568 = vmatprep.mubr.f32.mxu0 0.0
    %569 = vmatmul.mubr.f32.gmra.mrb[0].mxu0 %v481
    %v570 = vpop.f32.mrb[0].mxu0
    %v571 = vadd.f32 0.0, %v570
    %v572 = vpop.f32.mrb[0].mxu0
    %573 = vdwg.mxu0
    %v574 = vmax.f32 %v566, 0.0
    %v575 = vmax.f32 %v571, 0.0
    %s576 = scalar_lea.vmem [#allocation7], 256
    %v577 = vld [vmem:[%s576] sm:$0xff]
    %v578 = vld [vmem:[%s576 + $0x8] sm:$0xff]
    %v579 = vld [vmem:[%s576 + $0x10] sm:$0xff]
    %v580 = vld [vmem:[%s576 + $0x18] sm:$0xff]
    %v581 = vld [vmem:[%s576 + $0x20] sm:$0xff]
    %v582 = vld [vmem:[%s576 + $0x28] sm:$0xff]
    %v583 = vld [vmem:[%s576 + $0x30] sm:$0xff]
    %v584 = vld [vmem:[%s576 + $0x38] sm:$0xff]
    %v585 = vld [vmem:[%s576 + $0x40] sm:$0xff]
    %v586 = vld [vmem:[%s576 + $0x48] sm:$0xff]
    %v587 = vld [vmem:[%s576 + $0x50] sm:$0xff]
    %v588 = vld [vmem:[%s576 + $0x58] sm:$0xff]
    %v589 = vld [vmem:[%s576 + $0x60] sm:$0xff]
    %v590 = vld [vmem:[%s576 + $0x68] sm:$0xff]
    %v591 = vld [vmem:[%s576 + $0x70] sm:$0xff]
    %v592 = vld [vmem:[%s576 + $0x78] sm:$0xff]
    %s593 = scalar_lea.vmem %s3, 2
    %v594 = vld [vmem:[%s593] sm:$0x1]
    %v596 = vlaneseq
    %v597 = vshrl.u32 %v596, 7
    %v598 = vsub.s32 0, %v597
    %v599 = vrot.slane %v594, %v598
    %601 = vmatprep.subr.mxu0 0.0
    %602 = vmatpush1.msra.mxu0 %v577
    %603 = vmatprep.subr.mxu0 0.0
    %604 = vmatpush1.msra.mxu0 %v578
    %605 = vmatprep.subr.mxu0 0.0
    %606 = vmatpush1.msra.mxu0 %v579
    %607 = vmatprep.subr.mxu0 0.0
    %608 = vmatpush1.msra.mxu0 %v580
    %609 = vmatprep.subr.mxu0 0.0
    %610 = vmatpush1.msra.mxu0 %v581
    %611 = vmatprep.subr.mxu0 0.0
    %612 = vmatpush1.msra.mxu0 %v582
    %613 = vmatprep.subr.mxu0 0.0
    %614 = vmatpush1.msra.mxu0 %v583
    %615 = vmatprep.subr.mxu0 0.0
    %616 = vmatpush1.msra.mxu0 %v584
    %617 = vmatprep.subr.mxu0 0.0
    %618 = vmatpush1.msra.mxu0 %v585
    %619 = vmatprep.subr.mxu0 0.0
    %620 = vmatpush1.msra.mxu0 %v586
    %621 = vmatprep.subr.mxu0 0.0
    %622 = vmatpush1.msra.mxu0 %v587
    %623 = vmatprep.subr.mxu0 0.0
    %624 = vmatpush1.msra.mxu0 %v588
    %625 = vmatprep.subr.mxu0 0.0
    %626 = vmatpush1.msra.mxu0 %v589
    %627 = vmatprep.subr.mxu0 0.0
    %628 = vmatpush1.msra.mxu0 %v590
    %629 = vmatprep.subr.mxu0 0.0
    %630 = vmatpush1.msra.mxu0 %v591
    %631 = vmatprep.subr.mxu0 0.0
    %632 = vmatpush1.msra.mxu0 %v592
    %633 = vmatprep.subr.mxu0 0.0
    %634 = vmatpush1.msra.mxu0 0.0
    %635 = vmatprep.subr.mxu0 0.0
    %636 = vmatpush1.msra.mxu0 0.0
    %637 = vmatprep.subr.mxu0 0.0
    %638 = vmatpush1.msra.mxu0 0.0
    %639 = vmatprep.subr.mxu0 0.0
    %640 = vmatpush1.msra.mxu0 0.0
    %641 = vmatprep.subr.mxu0 0.0
    %642 = vmatpush1.msra.mxu0 0.0
    %643 = vmatprep.subr.mxu0 0.0
    %644 = vmatpush1.msra.mxu0 0.0
    %645 = vmatprep.subr.mxu0 0.0
    %646 = vmatpush1.msra.mxu0 0.0
    %647 = vmatprep.subr.mxu0 0.0
    %648 = vmatpush1.msra.mxu0 0.0
    %649 = vmatprep.subr.mxu0 0.0
    %650 = vmatpush1.msra.mxu0 0.0
    %651 = vmatprep.subr.mxu0 0.0
    %652 = vmatpush1.msra.mxu0 0.0
    %653 = vmatprep.subr.mxu0 0.0
    %654 = vmatpush1.msra.mxu0 0.0
    %655 = vmatprep.subr.mxu0 0.0
    %656 = vmatpush1.msra.mxu0 0.0
    %657 = vmatprep.subr.mxu0 0.0
    %658 = vmatpush1.msra.mxu0 0.0
    %659 = vmatprep.subr.mxu0 0.0
    %660 = vmatpush1.msra.mxu0 0.0
    %661 = vmatprep.subr.mxu0 0.0
    %662 = vmatpush1.msra.mxu0 0.0
    %663 = vmatprep.subr.mxu0 0.0
    %664 = vmatpush1.msra.mxu0 0.0
    %665 = vmatprep.mubr.f32.mxu0 0.0
    %666 = vmatmul.mubr.f32.gmra.mrb[0].mxu0 %v480
    %v667 = vpop.f32.mrb[0].mxu0
    %v668 = vadd.f32 %v599, %v667
    %v669 = vpop.f32.mrb[0].mxu0
    %670 = vmatprep.mubr.f32.mxu0 0.0
    %671 = vmatmul.mubr.f32.gmra.mrb[0].mxu0 %v481
    %v672 = vpop.f32.mrb[0].mxu0
    %v673 = vadd.f32 %v599, %v672
    %v674 = vpop.f32.mrb[0].mxu0
    %675 = vdwg.mxu0
    %v676 = vxor.u32 %v668, 2147483648
    %v677 = vxor.u32 %v673, 2147483648
    %v678 = vmul.f32 %v676, 1.442695
    %v679 = vpow.pop %v678
    %v680 = vmul.f32 %v677, 1.442695
    %v681 = vpow.pop %v680
    %v682 = vadd.f32 %v679, 1.0
    %v683 = vadd.f32 %v681, 1.0
    %v684 = vrcp.pop %v682
    %v685 = vmul.f32 1.0, %v684
    %v686 = vrcp.pop %v683
    %v687 = vmul.f32 1.0, %v686
    %v688 = vsub.f32 %v574, %v480
    %v689 = vsub.f32 %v575, %v481
    %v690 = vmul.f32 %v685, %v688
    %v691 = vmul.f32 %v687, %v689
    %v692 = vadd.f32 %v480, %v690
    %v693 = vadd.f32 %v481, %v691
    %s694 = scalar_lea.vmem [#allocation5], 384
    %v695 = vld [vmem:[%s694] sm:$0xff]
    %v696 = vld [vmem:[%s694 + $0x8] sm:$0xff]
    %v697 = vld [vmem:[%s694 + $0x10] sm:$0xff]
    %v698 = vld [vmem:[%s694 + $0x18] sm:$0xff]
    %v699 = vld [vmem:[%s694 + $0x20] sm:$0xff]
    %v700 = vld [vmem:[%s694 + $0x28] sm:$0xff]
    %v701 = vld [vmem:[%s694 + $0x30] sm:$0xff]
    %v702 = vld [vmem:[%s694 + $0x38] sm:$0xff]
    %v703 = vld [vmem:[%s694 + $0x40] sm:$0xff]
    %v704 = vld [vmem:[%s694 + $0x48] sm:$0xff]
    %v705 = vld [vmem:[%s694 + $0x50] sm:$0xff]
    %v706 = vld [vmem:[%s694 + $0x58] sm:$0xff]
    %v707 = vld [vmem:[%s694 + $0x60] sm:$0xff]
    %v708 = vld [vmem:[%s694 + $0x68] sm:$0xff]
    %v709 = vld [vmem:[%s694 + $0x70] sm:$0xff]
    %v710 = vld [vmem:[%s694 + $0x78] sm:$0xff]
    %711 = vmatprep.subr.mxu0 0.0
    %712 = vmatpush1.msra.mxu0 %v695
    %713 = vmatprep.subr.mxu0 0.0
    %714 = vmatpush1.msra.mxu0 %v696
    %715 = vmatprep.subr.mxu0 0.0
    %716 = vmatpush1.msra.mxu0 %v697
    %717 = vmatprep.subr.mxu0 0.0
    %718 = vmatpush1.msra.mxu0 %v698
    %719 = vmatprep.subr.mxu0 0.0
    %720 = vmatpush1.msra.mxu0 %v699
    %721 = vmatprep.subr.mxu0 0.0
    %722 = vmatpush1.msra.mxu0 %v700
    %723 = vmatprep.subr.mxu0 0.0
    %724 = vmatpush1.msra.mxu0 %v701
    %725 = vmatprep.subr.mxu0 0.0
    %726 = vmatpush1.msra.mxu0 %v702
    %727 = vmatprep.subr.mxu0 0.0
    %728 = vmatpush1.msra.mxu0 %v703
    %729 = vmatprep.subr.mxu0 0.0
    %730 = vmatpush1.msra.mxu0 %v704
    %731 = vmatprep.subr.mxu0 0.0
    %732 = vmatpush1.msra.mxu0 %v705
    %733 = vmatprep.subr.mxu0 0.0
    %734 = vmatpush1.msra.mxu0 %v706
    %735 = vmatprep.subr.mxu0 0.0
    %736 = vmatpush1.msra.mxu0 %v707
    %737 = vmatprep.subr.mxu0 0.0
    %738 = vmatpush1.msra.mxu0 %v708
    %739 = vmatprep.subr.mxu0 0.0
    %740 = vmatpush1.msra.mxu0 %v709
    %741 = vmatprep.subr.mxu0 0.0
    %742 = vmatpush1.msra.mxu0 %v710
    %743 = vmatprep.subr.mxu0 0.0
    %744 = vmatpush1.msra.mxu0 0.0
    %745 = vmatprep.subr.mxu0 0.0
    %746 = vmatpush1.msra.mxu0 0.0
    %747 = vmatprep.subr.mxu0 0.0
    %748 = vmatpush1.msra.mxu0 0.0
    %749 = vmatprep.subr.mxu0 0.0
    %750 = vmatpush1.msra.mxu0 0.0
    %751 = vmatprep.subr.mxu0 0.0
    %752 = vmatpush1.msra.mxu0 0.0
    %753 = vmatprep.subr.mxu0 0.0
    %754 = vmatpush1.msra.mxu0 0.0
    %755 = vmatprep.subr.mxu0 0.0
    %756 = vmatpush1.msra.mxu0 0.0
    %757 = vmatprep.subr.mxu0 0.0
    %758 = vmatpush1.msra.mxu0 0.0
    %759 = vmatprep.subr.mxu0 0.0
    %760 = vmatpush1.msra.mxu0 0.0
    %761 = vmatprep.subr.mxu0 0.0
    %762 = vmatpush1.msra.mxu0 0.0
    %763 = vmatprep.subr.mxu0 0.0
    %764 = vmatpush1.msra.mxu0 0.0
    %765 = vmatprep.subr.mxu0 0.0
    %766 = vmatpush1.msra.mxu0 0.0
    %767 = vmatprep.subr.mxu0 0.0
    %768 = vmatpush1.msra.mxu0 0.0
    %769 = vmatprep.subr.mxu0 0.0
    %770 = vmatpush1.msra.mxu0 0.0
    %771 = vmatprep.subr.mxu0 0.0
    %772 = vmatpush1.msra.mxu0 0.0
    %773 = vmatprep.subr.mxu0 0.0
    %774 = vmatpush1.msra.mxu0 0.0
    %775 = vmatprep.mubr.f32.mxu0 0.0
    %776 = vmatmul.mubr.f32.gmra.mrb[0].mxu0 %v692
    %v777 = vpop.f32.mrb[0].mxu0
    %v778 = vadd.f32 0.0, %v777
    %v779 = vpop.f32.mrb[0].mxu0
    %780 = vmatprep.mubr.f32.mxu0 0.0
    %781 = vmatmul.mubr.f32.gmra.mrb[0].mxu0 %v693
    %v782 = vpop.f32.mrb[0].mxu0
    %v783 = vadd.f32 0.0, %v782
    %v784 = vpop.f32.mrb[0].mxu0
    %785 = vdwg.mxu0
    %v786 = vmax.f32 %v778, 0.0
    %v787 = vmax.f32 %v783, 0.0
    %s788 = scalar_lea.vmem [#allocation7], 384
    %v789 = vld [vmem:[%s788] sm:$0xff]
    %v790 = vld [vmem:[%s788 + $0x8] sm:$0xff]
    %v791 = vld [vmem:[%s788 + $0x10] sm:$0xff]
    %v792 = vld [vmem:[%s788 + $0x18] sm:$0xff]
    %v793 = vld [vmem:[%s788 + $0x20] sm:$0xff]
    %v794 = vld [vmem:[%s788 + $0x28] sm:$0xff]
    %v795 = vld [vmem:[%s788 + $0x30] sm:$0xff]
    %v796 = vld [vmem:[%s788 + $0x38] sm:$0xff]
    %v797 = vld [vmem:[%s788 + $0x40] sm:$0xff]
    %v798 = vld [vmem:[%s788 + $0x48] sm:$0xff]
    %v799 = vld [vmem:[%s788 + $0x50] sm:$0xff]
    %v800 = vld [vmem:[%s788 + $0x58] sm:$0xff]
    %v801 = vld [vmem:[%s788 + $0x60] sm:$0xff]
    %v802 = vld [vmem:[%s788 + $0x68] sm:$0xff]
    %v803 = vld [vmem:[%s788 + $0x70] sm:$0xff]
    %v804 = vld [vmem:[%s788 + $0x78] sm:$0xff]
    %s805 = scalar_lea.vmem %s3, 3
    %v806 = vld [vmem:[%s805] sm:$0x1]
    %v808 = vlaneseq
    %v809 = vshrl.u32 %v808, 7
    %v810 = vsub.s32 0, %v809
    %v811 = vrot.slane %v806, %v810
    %813 = vmatprep.subr.mxu0 0.0
    %814 = vmatpush1.msra.mxu0 %v789
    %815 = vmatprep.subr.mxu0 0.0
    %816 = vmatpush1.msra.mxu0 %v790
    %817 = vmatprep.subr.mxu0 0.0
    %818 = vmatpush1.msra.mxu0 %v791
    %819 = vmatprep.subr.mxu0 0.0
    %820 = vmatpush1.msra.mxu0 %v792
    %821 = vmatprep.subr.mxu0 0.0
    %822 = vmatpush1.msra.mxu0 %v793
    %823 = vmatprep.subr.mxu0 0.0
    %824 = vmatpush1.msra.mxu0 %v794
    %825 = vmatprep.subr.mxu0 0.0
    %826 = vmatpush1.msra.mxu0 %v795
    %827 = vmatprep.subr.mxu0 0.0
    %828 = vmatpush1.msra.mxu0 %v796
    %829 = vmatprep.subr.mxu0 0.0
    %830 = vmatpush1.msra.mxu0 %v797
    %831 = vmatprep.subr.mxu0 0.0
    %832 = vmatpush1.msra.mxu0 %v798
    %833 = vmatprep.subr.mxu0 0.0
    %834 = vmatpush1.msra.mxu0 %v799
    %835 = vmatprep.subr.mxu0 0.0
    %836 = vmatpush1.msra.mxu0 %v800
    %837 = vmatprep.subr.mxu0 0.0
    %838 = vmatpush1.msra.mxu0 %v801
    %839 = vmatprep.subr.mxu0 0.0
    %840 = vmatpush1.msra.mxu0 %v802
    %841 = vmatprep.subr.mxu0 0.0
    %842 = vmatpush1.msra.mxu0 %v803
    %843 = vmatprep.subr.mxu0 0.0
    %844 = vmatpush1.msra.mxu0 %v804
    %845 = vmatprep.subr.mxu0 0.0
    %846 = vmatpush1.msra.mxu0 0.0
    %847 = vmatprep.subr.mxu0 0.0
    %848 = vmatpush1.msra.mxu0 0.0
    %849 = vmatprep.subr.mxu0 0.0
    %850 = vmatpush1.msra.mxu0 0.0
    %851 = vmatprep.subr.mxu0 0.0
    %852 = vmatpush1.msra.mxu0 0.0
    %853 = vmatprep.subr.mxu0 0.0
    %854 = vmatpush1.msra.mxu0 0.0
    %855 = vmatprep.subr.mxu0 0.0
    %856 = vmatpush1.msra.mxu0 0.0
    %857 = vmatprep.subr.mxu0 0.0
    %858 = vmatpush1.msra.mxu0 0.0
    %859 = vmatprep.subr.mxu0 0.0
    %860 = vmatpush1.msra.mxu0 0.0
    %861 = vmatprep.subr.mxu0 0.0
    %862 = vmatpush1.msra.mxu0 0.0
    %863 = vmatprep.subr.mxu0 0.0
    %864 = vmatpush1.msra.mxu0 0.0
    %865 = vmatprep.subr.mxu0 0.0
    %866 = vmatpush1.msra.mxu0 0.0
    %867 = vmatprep.subr.mxu0 0.0
    %868 = vmatpush1.msra.mxu0 0.0
    %869 = vmatprep.subr.mxu0 0.0
    %870 = vmatpush1.msra.mxu0 0.0
    %871 = vmatprep.subr.mxu0 0.0
    %872 = vmatpush1.msra.mxu0 0.0
    %873 = vmatprep.subr.mxu0 0.0
    %874 = vmatpush1.msra.mxu0 0.0
    %875 = vmatprep.subr.mxu0 0.0
    %876 = vmatpush1.msra.mxu0 0.0
    %877 = vmatprep.mubr.f32.mxu0 0.0
    %878 = vmatmul.mubr.f32.gmra.mrb[0].mxu0 %v692
    %v879 = vpop.f32.mrb[0].mxu0
    %v880 = vadd.f32 %v811, %v879
    %v881 = vpop.f32.mrb[0].mxu0
    %882 = vmatprep.mubr.f32.mxu0 0.0
    %883 = vmatmul.mubr.f32.gmra.mrb[0].mxu0 %v693
    %v884 = vpop.f32.mrb[0].mxu0
    %v885 = vadd.f32 %v811, %v884
    %v886 = vpop.f32.mrb[0].mxu0
    %887 = vdwg.mxu0
    %v888 = vxor.u32 %v880, 2147483648
    %v889 = vxor.u32 %v885, 2147483648
    %v890 = vmul.f32 %v888, 1.442695
    %v891 = vpow.pop %v890
    %v892 = vmul.f32 %v889, 1.442695
    %v893 = vpow.pop %v892
    %v894 = vadd.f32 %v891, 1.0
    %v895 = vadd.f32 %v893, 1.0
    %v896 = vrcp.pop %v894
    %v897 = vmul.f32 1.0, %v896
    %v898 = vrcp.pop %v895
    %v899 = vmul.f32 1.0, %v898
    %v900 = vsub.f32 %v786, %v692
    %v901 = vsub.f32 %v787, %v693
    %v902 = vmul.f32 %v897, %v900
    %v903 = vmul.f32 %v899, %v901
    %v904 = vadd.f32 %v692, %v902
    %v905 = vadd.f32 %v693, %v903
    %906 = vst [vmem:[#allocation8] sm:$0xff] %v904
    %907 = vst [vmem:[#allocation8 + $0x8] sm:$0xff] %v905
    // Predicated region
    $region30: #{tpu_custom_call.1} parent=1 // pred_check
      _
    $region31: #{tpu_custom_call.1} parent=1 // pred_check_branch
      %909 = sbr.rel (0) target = $region33
    $region32: #{tpu_custom_call.1} parent=1 // pred_region
      %s911 = ssub.s32 256, 256
      %912 = vsyncadd [#allocation4], %s911
      %s913 = sshll.u32 [#allocation8], 4
      %s914 = int_to_ptr.vmem [resolvable:$true] %s913
      %919 = dma.vmem_to_hbm [thread:$0]  %s914, 256, %s4, [#allocation4], 128, 128, 8
    $region33: #{tpu_custom_call.1} parent=1 // pred_fallthru
      _
    // Predicated region
    $region34: #{tpu_custom_call.1} parent=1 // pred_check
      _
    $region35: #{tpu_custom_call.1} parent=1 // pred_check_branch
      %921 = sbr.rel (0) target = $region37
    $region36: #{tpu_custom_call.1} parent=1 // pred_region
      %922 = dma.done [#allocation4], 256
    $region37: #{tpu_custom_call.1} parent=1 // pred_fallthru
      _
    %923 = vsyncpa [#allocation3], 1
    %924 = vsyncpa [#allocation6], 1
    %925 = vsyncpa [#allocation4], 1

</llo_original>
